<compile_context>
chip_gen: v5e
topology: v5e:2x2
jax: 0.10.0
libtpu: 0.0.40
codegen_flags: <defaults>
</compile_context>

<pallas_src>
import jax
import jax.numpy as jnp
from jax.experimental import pallas as pl
from jax.experimental.pallas import tpu as pltpu


# ---------------------------------------------------------------------------
# Pallas kernel: fused embedding-gather + two 2-layer MLP towers
# ---------------------------------------------------------------------------
def _fused_two_tower_kernel(
    idx_ref,                     # [bm, 2] int32 : col 0 = gender, col 1 = category
    utab_ref, itab_ref,          # [NG, H] / [NC, H] f32 : table @ W1_emb + b1 (pre-mult)
    dept_ref, itxt_ref,          # [bm, T] bf16 text embeddings
    uw1t_ref, iw1t_ref,          # [T, H] bf16 layer-1 text weights
    w2_ref,                      # [2H, OUT] bf16 stacked layer-2 weights (zero-padded)
    b2_ref,                      # [1, OUT] f32 stacked layer-2 bias
    o_ref,                       # [bm, OUT] f32  (user 0:64 | item 64:128)
):
    f32, bf16 = jnp.float32, jnp.bfloat16

    idx = idx_ref[...]
    gidx = idx[:, 0:1]
    cidx = idx[:, 1:2]

    def gather_rows(table, idx_col):
        # table: [R, H] with tiny static R (3 / 10). Unrolled one-hot select ->
        # pure VPU broadcast/mul/add; exact gather.
        # TODO(synk): out-of-range indices produce a zero row instead of raising
        # (PyTorch nn.Embedding would error); padded tail rows rely on this.
        acc = jnp.zeros((idx_col.shape[0], table.shape[1]), f32)
        for r in range(table.shape[0]):
            mask = (idx_col == r).astype(f32)          # [bm, 1]
            acc = acc + mask * table[r:r + 1, :]       # -> [bm, H]
        return acc

    # Layer 1: pre-multiplied embedding rows (bias folded in) + text matmul, ReLU.
    hu = gather_rows(utab_ref[...], gidx) + jnp.dot(
        dept_ref[...], uw1t_ref[...], preferred_element_type=f32)
    hu = jnp.maximum(hu, 0.0).astype(bf16)             # [bm, H]

    hi = gather_rows(itab_ref[...], cidx) + jnp.dot(
        itxt_ref[...], iw1t_ref[...], preferred_element_type=f32)
    hi = jnp.maximum(hi, 0.0).astype(bf16)             # [bm, H]

    # Layer 2: single K=2H matmul onto a lane-dense [bm, 128] output.
    h = jnp.concatenate([hu, hi], axis=-1)             # [bm, 2H] bf16
    y = jnp.dot(h, w2_ref[...], preferred_element_type=f32) + b2_ref[...]
    o_ref[...] = y.astype(o_ref.dtype)


def _round_up(x, m):
    return ((x + m - 1) // m) * m


def _choose_tiling(B):
    """Returns (bm, B_pad): batch tile (multiple of 8) and padded batch size."""
    b_pad = _round_up(B, 8)
    if b_pad <= 8:
        return b_pad, b_pad
    # >= 2 grid steps whenever possible (v7x 2-TC sharding), capped at 512 rows so
    # double-buffered tiles stay far inside the scoped VMEM limit on every chip.
    bm = min(512, _round_up(pl.cdiv(b_pad, 2), 8))
    return bm, _round_up(b_pad, bm)


def _fused_two_tower_call(params, idx, dept_text, item_text):
    B, T = dept_text.shape
    NG, H = params["user_tab_h"].shape
    NC, _ = params["item_tab_h"].shape
    OUT = params["b2_cat"].shape[1]                    # 128 (user 64 | item 64)

    bm, b_pad = _choose_tiling(B)
    if b_pad != B:
        pad = ((0, b_pad - B), (0, 0))
        idx = jnp.pad(idx, pad)
        dept_text = jnp.pad(dept_text, pad)
        item_text = jnp.pad(item_text, pad)
    grid = (b_pad // bm,)

    batch_spec = lambda shape: pl.BlockSpec(shape, lambda i: (i, 0))
    pinned = lambda shape: pl.BlockSpec(shape, lambda i: (0, 0))

    out = pl.pallas_call(
        _fused_two_tower_kernel,
        out_shape=jax.ShapeDtypeStruct((b_pad, OUT), jnp.float32),
        grid=grid,
        in_specs=[
            batch_spec((bm, 2)),            # packed gender/category indices
            pinned((NG, H)),                # pre-multiplied gender table (+ bias)
            pinned((NC, H)),                # pre-multiplied category table (+ bias)
            batch_spec((bm, T)),            # dept text emb (bf16)
            batch_spec((bm, T)),            # item text emb (bf16)
            pinned((T, H)),                 # user layer-1 text weights (bf16)
            pinned((T, H)),                 # item layer-1 text weights (bf16)
            pinned((2 * H, OUT)),           # stacked layer-2 weights (bf16)
            pinned((1, OUT)),               # stacked layer-2 bias (f32)
        ],
        out_specs=batch_spec((bm, OUT)),
        compiler_params=pltpu.CompilerParams(
            dimension_semantics=("parallel",),
        ),
    )(idx,
      params["user_tab_h"], params["item_tab_h"],
      dept_text, item_text,
      params["user_w1_txt"], params["item_w1_txt"],
      params["w2_stack"], params["b2_cat"])

    return out[:B] if b_pad != B else out


# ---------------------------------------------------------------------------
# Model: parameters + forward
# ---------------------------------------------------------------------------
def init_params(key, num_genders, num_cats, text_emb_dim=384, emb_dim=32):
    ks = jax.random.split(key, 10)

    def linear(kw, kb, fan_in, fan_out):
        bound = 1.0 / (fan_in ** 0.5)       # PyTorch-like uniform init
        w = jax.random.uniform(kw, (fan_in, fan_out), jnp.float32, -bound, bound)
        b = jax.random.uniform(kb, (1, fan_out), jnp.float32, -bound, bound)
        return w, b

    gender_table = jax.random.normal(ks[0], (num_genders, emb_dim), jnp.float32)
    cat_table = jax.random.normal(ks[1], (num_cats, emb_dim), jnp.float32)

    uw1, ub1 = linear(ks[2], ks[3], emb_dim + text_emb_dim, 128)
    uw2, ub2 = linear(ks[4], ks[5], 128, 64)
    iw1, ib1 = linear(ks[6], ks[7], emb_dim + text_emb_dim, 128)
    iw2, ib2 = linear(ks[8], ks[9], 128, 64)

    zeros64 = jnp.zeros((128, 64), jnp.float32)
    w2_stack = jnp.concatenate(
        [jnp.concatenate([uw2, zeros64], axis=1),       # user -> cols 0:64
         jnp.concatenate([zeros64, iw2], axis=1)],      # item -> cols 64:128
        axis=0)                                          # [256, 128]

    return {
        # Tiny tables pre-multiplied into hidden space (bias folded in), kept f32.
        "user_tab_h": gender_table @ uw1[:emb_dim] + ub1,     # [NG, 128] f32
        "item_tab_h": cat_table @ iw1[:emb_dim] + ib1,        # [NC, 128] f32
        # Layer-1 text-block weights, bf16 (MXU-friendly, half the DMA bytes).
        "user_w1_txt": uw1[emb_dim:].astype(jnp.bfloat16),    # [384, 128]
        "item_w1_txt": iw1[emb_dim:].astype(jnp.bfloat16),    # [384, 128]
        # Layer-2 weights stacked & zero-padded for a single K=256 matmul.
        "w2_stack": w2_stack.astype(jnp.bfloat16),             # [256, 128]
        "b2_cat": jnp.concatenate([ub2, ib2], axis=1),          # [1, 128] f32
    }


@jax.jit
def two_tower_forward(params, gender, dept_text_emb, category, item_text_emb):
    B = dept_text_emb.shape[0]
    idx = jnp.stack([gender.astype(jnp.int32),
                     category.astype(jnp.int32)], axis=1)       # [B, 2]
    dept = dept_text_emb.astype(jnp.bfloat16)                   # bf16 in HBM
    itxt = item_text_emb.astype(jnp.bfloat16)
    out = _fused_two_tower_call(params, idx, dept, itxt)
    half = out.shape[1] // 2
    return out[:, :half], out[:, half:]


def predict_score(user_emb, item_emb):
    return jnp.sum(user_emb * item_emb, axis=1)


# ---------------------------------------------------------------------------
if __name__ == "__main__":
    key = jax.random.PRNGKey(0)
    k_param, k_g, k_c, k_dt, k_it = jax.random.split(key, 5)

    num_genders, num_cats = 3, 10
    text_emb_dim, emb_dim = 384, 32
    batch = 8

    params = init_params(k_param, num_genders, num_cats, text_emb_dim, emb_dim)

    gender = jax.random.randint(k_g, (batch,), 0, num_genders)
    category = jax.random.randint(k_c, (batch,), 0, num_cats)
    dept_text_emb = jax.random.normal(k_dt, (batch, text_emb_dim), jnp.float32)
    item_text_emb = jax.random.normal(k_it, (batch, text_emb_dim), jnp.float32)

    user_emb, item_emb = two_tower_forward(
        params, gender, dept_text_emb, category, item_text_emb)
    jax.block_until_ready((user_emb, item_emb))

    # Reference: same math in plain JAX with matching bf16 weight/activation rounding
    # and f32 accumulation (weights/text are intentionally stored in bf16 for the MXU).
    def ref_forward(p, g, dept, cat, itxt):
        bf, f32 = jnp.bfloat16, jnp.float32
        rq = lambda a: a.astype(bf).astype(f32)          # round-trip through bf16
        hu = jnp.maximum(
            p["user_tab_h"][g] + rq(dept) @ p["user_w1_txt"].astype(f32), 0.0)
        hi = jnp.maximum(
            p["item_tab_h"][cat] + rq(itxt) @ p["item_w1_txt"].astype(f32), 0.0)
        hu, hi = rq(hu), rq(hi)
        w2 = p["w2_stack"].astype(f32)
        user = hu @ w2[:128, :64] + p["b2_cat"][:, :64]
        item = hi @ w2[128:, 64:] + p["b2_cat"][:, 64:]
        return user, item

    ref_user, ref_item = ref_forward(params, gender, dept_text_emb, category,
                                     item_text_emb)
    assert user_emb.shape == (batch, 64) and item_emb.shape == (batch, 64)
    assert jnp.allclose(user_emb, ref_user, atol=1e-3, rtol=1e-3)
    assert jnp.allclose(item_emb, ref_item, atol=1e-3, rtol=1e-3)

    _ = jax.block_until_ready(predict_score(user_emb, item_emb))

    print("KERNEL_OK")
</pallas_src>

<mosaic_0001>
module attributes {stable_mosaic.version = 11 : i64} {
  func.func @_fused_two_tower_kernel(%arg0: i32, %arg1: memref<8x2xi32, #tpu.memory_space<vmem>>, %arg2: memref<3x128xf32, #tpu.memory_space<vmem>>, %arg3: memref<10x128xf32, #tpu.memory_space<vmem>>, %arg4: memref<8x384xbf16, #tpu.memory_space<vmem>>, %arg5: memref<8x384xbf16, #tpu.memory_space<vmem>>, %arg6: memref<384x128xbf16, #tpu.memory_space<vmem>>, %arg7: memref<384x128xbf16, #tpu.memory_space<vmem>>, %arg8: memref<256x128xbf16, #tpu.memory_space<vmem>>, %arg9: memref<1x128xf32, #tpu.memory_space<vmem>>, %arg10: memref<8x128xf32, #tpu.memory_space<vmem>>) attributes {dimension_semantics = [#tpu.dimension_semantics<parallel>], iteration_bounds = array<i64: 1>, scalar_prefetch = 0 : i64, scratch_operands = 0 : i64, tpu.core_type = #tpu.core_type<tc>, window_params = [{transform_indices = @transform_0, window_bounds = array<i64: 8, 2>}, {pipeline_mode = #tpu.pipeline_mode<synchronous>, transform_indices = @transform_1, window_bounds = array<i64: 3, 128>}, {pipeline_mode = #tpu.pipeline_mode<synchronous>, transform_indices = @transform_2, window_bounds = array<i64: 10, 128>}, {transform_indices = @transform_3, window_bounds = array<i64: 8, 384>}, {transform_indices = @transform_4, window_bounds = array<i64: 8, 384>}, {pipeline_mode = #tpu.pipeline_mode<synchronous>, transform_indices = @transform_5, window_bounds = array<i64: 384, 128>}, {pipeline_mode = #tpu.pipeline_mode<synchronous>, transform_indices = @transform_6, window_bounds = array<i64: 384, 128>}, {pipeline_mode = #tpu.pipeline_mode<synchronous>, transform_indices = @transform_7, window_bounds = array<i64: 256, 128>}, {pipeline_mode = #tpu.pipeline_mode<synchronous>, transform_indices = @transform_8, window_bounds = array<i64: 1, 128>}, {transform_indices = @transform_9, window_bounds = array<i64: 8, 128>}]} {
    %c0 = arith.constant 0 : index
    %c0_0 = arith.constant 0 : index
    %0 = vector.load %arg1[%c0, %c0_0] : memref<8x2xi32, #tpu.memory_space<vmem>>, vector<8x2xi32>
    %1 = vector.extract_strided_slice %0 {offsets = [0, 0], sizes = [8, 1], strides = [1, 1]} : vector<8x2xi32> to vector<8x1xi32>
    %2 = vector.extract_strided_slice %0 {offsets = [0, 1], sizes = [8, 1], strides = [1, 1]} : vector<8x2xi32> to vector<8x1xi32>
    %c0_1 = arith.constant 0 : index
    %c0_2 = arith.constant 0 : index
    %3 = vector.load %arg2[%c0_1, %c0_2] : memref<3x128xf32, #tpu.memory_space<vmem>>, vector<3x128xf32>
    %cst = arith.constant 0.000000e+00 : f32
    %4 = vector.broadcast %cst : f32 to vector<8x128xf32>
    %c0_i32 = arith.constant 0 : i32
    %5 = vector.broadcast %c0_i32 : i32 to vector<8x1xi32>
    %6 = arith.cmpi eq, %1, %5 : vector<8x1xi32>
    %7 = arith.extui %6 : vector<8x1xi1> to vector<8x1xi32>
    %8 = arith.sitofp %7 : vector<8x1xi32> to vector<8x1xf32>
    %9 = vector.extract_strided_slice %3 {offsets = [0, 0], sizes = [1, 128], strides = [1, 1]} : vector<3x128xf32> to vector<1x128xf32>
    %10 = vector.broadcast %8 : vector<8x1xf32> to vector<8x128xf32>
    %11 = vector.broadcast %9 : vector<1x128xf32> to vector<8x128xf32>
    %12 = arith.mulf %10, %11 : vector<8x128xf32>
    %13 = arith.addf %4, %12 : vector<8x128xf32>
    %c1_i32 = arith.constant 1 : i32
    %14 = vector.broadcast %c1_i32 : i32 to vector<8x1xi32>
    %15 = arith.cmpi eq, %1, %14 : vector<8x1xi32>
    %16 = arith.extui %15 : vector<8x1xi1> to vector<8x1xi32>
    %17 = arith.sitofp %16 : vector<8x1xi32> to vector<8x1xf32>
    %18 = vector.extract_strided_slice %3 {offsets = [1, 0], sizes = [1, 128], strides = [1, 1]} : vector<3x128xf32> to vector<1x128xf32>
    %19 = vector.broadcast %17 : vector<8x1xf32> to vector<8x128xf32>
    %20 = vector.broadcast %18 : vector<1x128xf32> to vector<8x128xf32>
    %21 = arith.mulf %19, %20 : vector<8x128xf32>
    %22 = arith.addf %13, %21 : vector<8x128xf32>
    %c2_i32 = arith.constant 2 : i32
    %23 = vector.broadcast %c2_i32 : i32 to vector<8x1xi32>
    %24 = arith.cmpi eq, %1, %23 : vector<8x1xi32>
    %25 = arith.extui %24 : vector<8x1xi1> to vector<8x1xi32>
    %26 = arith.sitofp %25 : vector<8x1xi32> to vector<8x1xf32>
    %27 = vector.extract_strided_slice %3 {offsets = [2, 0], sizes = [1, 128], strides = [1, 1]} : vector<3x128xf32> to vector<1x128xf32>
    %28 = vector.broadcast %26 : vector<8x1xf32> to vector<8x128xf32>
    %29 = vector.broadcast %27 : vector<1x128xf32> to vector<8x128xf32>
    %30 = arith.mulf %28, %29 : vector<8x128xf32>
    %31 = arith.addf %22, %30 : vector<8x128xf32>
    %c0_3 = arith.constant 0 : index
    %c0_4 = arith.constant 0 : index
    %32 = vector.load %arg4[%c0_3, %c0_4] : memref<8x384xbf16, #tpu.memory_space<vmem>>, vector<8x384xbf16>
    %c0_5 = arith.constant 0 : index
    %c0_6 = arith.constant 0 : index
    %33 = vector.load %arg6[%c0_5, %c0_6] : memref<384x128xbf16, #tpu.memory_space<vmem>>, vector<384x128xbf16>
    %cst_7 = arith.constant dense<0.000000e+00> : vector<8x128xf32>
    %34 = tpu.matmul %32, %33, %cst_7 {dimension_numbers = #tpu.dot_dimension_numbers<[1], [0], [0], [1], [0, 0, 1, 1], [], []>} : vector<8x384xbf16>, vector<384x128xbf16>, vector<8x128xf32> -> vector<8x128xf32>
    %35 = arith.addf %31, %34 : vector<8x128xf32>
    %cst_8 = arith.constant 0.000000e+00 : f32
    %36 = vector.broadcast %cst_8 : f32 to vector<8x128xf32>
    %37 = arith.maximumf %35, %36 : vector<8x128xf32>
    %38 = arith.truncf %37 : vector<8x128xf32> to vector<8x128xbf16>
    %c0_9 = arith.constant 0 : index
    %c0_10 = arith.constant 0 : index
    %39 = vector.load %arg3[%c0_9, %c0_10] : memref<10x128xf32, #tpu.memory_space<vmem>>, vector<10x128xf32>
    %cst_11 = arith.constant 0.000000e+00 : f32
    %40 = vector.broadcast %cst_11 : f32 to vector<8x128xf32>
    %c0_i32_12 = arith.constant 0 : i32
    %41 = vector.broadcast %c0_i32_12 : i32 to vector<8x1xi32>
    %42 = arith.cmpi eq, %2, %41 : vector<8x1xi32>
    %43 = arith.extui %42 : vector<8x1xi1> to vector<8x1xi32>
    %44 = arith.sitofp %43 : vector<8x1xi32> to vector<8x1xf32>
    %45 = vector.extract_strided_slice %39 {offsets = [0, 0], sizes = [1, 128], strides = [1, 1]} : vector<10x128xf32> to vector<1x128xf32>
    %46 = vector.broadcast %44 : vector<8x1xf32> to vector<8x128xf32>
    %47 = vector.broadcast %45 : vector<1x128xf32> to vector<8x128xf32>
    %48 = arith.mulf %46, %47 : vector<8x128xf32>
    %49 = arith.addf %40, %48 : vector<8x128xf32>
    %c1_i32_13 = arith.constant 1 : i32
    %50 = vector.broadcast %c1_i32_13 : i32 to vector<8x1xi32>
    %51 = arith.cmpi eq, %2, %50 : vector<8x1xi32>
    %52 = arith.extui %51 : vector<8x1xi1> to vector<8x1xi32>
    %53 = arith.sitofp %52 : vector<8x1xi32> to vector<8x1xf32>
    %54 = vector.extract_strided_slice %39 {offsets = [1, 0], sizes = [1, 128], strides = [1, 1]} : vector<10x128xf32> to vector<1x128xf32>
    %55 = vector.broadcast %53 : vector<8x1xf32> to vector<8x128xf32>
    %56 = vector.broadcast %54 : vector<1x128xf32> to vector<8x128xf32>
    %57 = arith.mulf %55, %56 : vector<8x128xf32>
    %58 = arith.addf %49, %57 : vector<8x128xf32>
    %c2_i32_14 = arith.constant 2 : i32
    %59 = vector.broadcast %c2_i32_14 : i32 to vector<8x1xi32>
    %60 = arith.cmpi eq, %2, %59 : vector<8x1xi32>
    %61 = arith.extui %60 : vector<8x1xi1> to vector<8x1xi32>
    %62 = arith.sitofp %61 : vector<8x1xi32> to vector<8x1xf32>
    %63 = vector.extract_strided_slice %39 {offsets = [2, 0], sizes = [1, 128], strides = [1, 1]} : vector<10x128xf32> to vector<1x128xf32>
    %64 = vector.broadcast %62 : vector<8x1xf32> to vector<8x128xf32>
    %65 = vector.broadcast %63 : vector<1x128xf32> to vector<8x128xf32>
    %66 = arith.mulf %64, %65 : vector<8x128xf32>
    %67 = arith.addf %58, %66 : vector<8x128xf32>
    %c3_i32 = arith.constant 3 : i32
    %68 = vector.broadcast %c3_i32 : i32 to vector<8x1xi32>
    %69 = arith.cmpi eq, %2, %68 : vector<8x1xi32>
    %70 = arith.extui %69 : vector<8x1xi1> to vector<8x1xi32>
    %71 = arith.sitofp %70 : vector<8x1xi32> to vector<8x1xf32>
    %72 = vector.extract_strided_slice %39 {offsets = [3, 0], sizes = [1, 128], strides = [1, 1]} : vector<10x128xf32> to vector<1x128xf32>
    %73 = vector.broadcast %71 : vector<8x1xf32> to vector<8x128xf32>
    %74 = vector.broadcast %72 : vector<1x128xf32> to vector<8x128xf32>
    %75 = arith.mulf %73, %74 : vector<8x128xf32>
    %76 = arith.addf %67, %75 : vector<8x128xf32>
    %c4_i32 = arith.constant 4 : i32
    %77 = vector.broadcast %c4_i32 : i32 to vector<8x1xi32>
    %78 = arith.cmpi eq, %2, %77 : vector<8x1xi32>
    %79 = arith.extui %78 : vector<8x1xi1> to vector<8x1xi32>
    %80 = arith.sitofp %79 : vector<8x1xi32> to vector<8x1xf32>
    %81 = vector.extract_strided_slice %39 {offsets = [4, 0], sizes = [1, 128], strides = [1, 1]} : vector<10x128xf32> to vector<1x128xf32>
    %82 = vector.broadcast %80 : vector<8x1xf32> to vector<8x128xf32>
    %83 = vector.broadcast %81 : vector<1x128xf32> to vector<8x128xf32>
    %84 = arith.mulf %82, %83 : vector<8x128xf32>
    %85 = arith.addf %76, %84 : vector<8x128xf32>
    %c5_i32 = arith.constant 5 : i32
    %86 = vector.broadcast %c5_i32 : i32 to vector<8x1xi32>
    %87 = arith.cmpi eq, %2, %86 : vector<8x1xi32>
    %88 = arith.extui %87 : vector<8x1xi1> to vector<8x1xi32>
    %89 = arith.sitofp %88 : vector<8x1xi32> to vector<8x1xf32>
    %90 = vector.extract_strided_slice %39 {offsets = [5, 0], sizes = [1, 128], strides = [1, 1]} : vector<10x128xf32> to vector<1x128xf32>
    %91 = vector.broadcast %89 : vector<8x1xf32> to vector<8x128xf32>
    %92 = vector.broadcast %90 : vector<1x128xf32> to vector<8x128xf32>
    %93 = arith.mulf %91, %92 : vector<8x128xf32>
    %94 = arith.addf %85, %93 : vector<8x128xf32>
    %c6_i32 = arith.constant 6 : i32
    %95 = vector.broadcast %c6_i32 : i32 to vector<8x1xi32>
    %96 = arith.cmpi eq, %2, %95 : vector<8x1xi32>
    %97 = arith.extui %96 : vector<8x1xi1> to vector<8x1xi32>
    %98 = arith.sitofp %97 : vector<8x1xi32> to vector<8x1xf32>
    %99 = vector.extract_strided_slice %39 {offsets = [6, 0], sizes = [1, 128], strides = [1, 1]} : vector<10x128xf32> to vector<1x128xf32>
    %100 = vector.broadcast %98 : vector<8x1xf32> to vector<8x128xf32>
    %101 = vector.broadcast %99 : vector<1x128xf32> to vector<8x128xf32>
    %102 = arith.mulf %100, %101 : vector<8x128xf32>
    %103 = arith.addf %94, %102 : vector<8x128xf32>
    %c7_i32 = arith.constant 7 : i32
    %104 = vector.broadcast %c7_i32 : i32 to vector<8x1xi32>
    %105 = arith.cmpi eq, %2, %104 : vector<8x1xi32>
    %106 = arith.extui %105 : vector<8x1xi1> to vector<8x1xi32>
    %107 = arith.sitofp %106 : vector<8x1xi32> to vector<8x1xf32>
    %108 = vector.extract_strided_slice %39 {offsets = [7, 0], sizes = [1, 128], strides = [1, 1]} : vector<10x128xf32> to vector<1x128xf32>
    %109 = vector.broadcast %107 : vector<8x1xf32> to vector<8x128xf32>
    %110 = vector.broadcast %108 : vector<1x128xf32> to vector<8x128xf32>
    %111 = arith.mulf %109, %110 : vector<8x128xf32>
    %112 = arith.addf %103, %111 : vector<8x128xf32>
    %c8_i32 = arith.constant 8 : i32
    %113 = vector.broadcast %c8_i32 : i32 to vector<8x1xi32>
    %114 = arith.cmpi eq, %2, %113 : vector<8x1xi32>
    %115 = arith.extui %114 : vector<8x1xi1> to vector<8x1xi32>
    %116 = arith.sitofp %115 : vector<8x1xi32> to vector<8x1xf32>
    %117 = vector.extract_strided_slice %39 {offsets = [8, 0], sizes = [1, 128], strides = [1, 1]} : vector<10x128xf32> to vector<1x128xf32>
    %118 = vector.broadcast %116 : vector<8x1xf32> to vector<8x128xf32>
    %119 = vector.broadcast %117 : vector<1x128xf32> to vector<8x128xf32>
    %120 = arith.mulf %118, %119 : vector<8x128xf32>
    %121 = arith.addf %112, %120 : vector<8x128xf32>
    %c9_i32 = arith.constant 9 : i32
    %122 = vector.broadcast %c9_i32 : i32 to vector<8x1xi32>
    %123 = arith.cmpi eq, %2, %122 : vector<8x1xi32>
    %124 = arith.extui %123 : vector<8x1xi1> to vector<8x1xi32>
    %125 = arith.sitofp %124 : vector<8x1xi32> to vector<8x1xf32>
    %126 = vector.extract_strided_slice %39 {offsets = [9, 0], sizes = [1, 128], strides = [1, 1]} : vector<10x128xf32> to vector<1x128xf32>
    %127 = vector.broadcast %125 : vector<8x1xf32> to vector<8x128xf32>
    %128 = vector.broadcast %126 : vector<1x128xf32> to vector<8x128xf32>
    %129 = arith.mulf %127, %128 : vector<8x128xf32>
    %130 = arith.addf %121, %129 : vector<8x128xf32>
    %c0_15 = arith.constant 0 : index
    %c0_16 = arith.constant 0 : index
    %131 = vector.load %arg5[%c0_15, %c0_16] : memref<8x384xbf16, #tpu.memory_space<vmem>>, vector<8x384xbf16>
    %c0_17 = arith.constant 0 : index
    %c0_18 = arith.constant 0 : index
    %132 = vector.load %arg7[%c0_17, %c0_18] : memref<384x128xbf16, #tpu.memory_space<vmem>>, vector<384x128xbf16>
    %cst_19 = arith.constant dense<0.000000e+00> : vector<8x128xf32>
    %133 = tpu.matmul %131, %132, %cst_19 {dimension_numbers = #tpu.dot_dimension_numbers<[1], [0], [0], [1], [0, 0, 1, 1], [], []>} : vector<8x384xbf16>, vector<384x128xbf16>, vector<8x128xf32> -> vector<8x128xf32>
    %134 = arith.addf %130, %133 : vector<8x128xf32>
    %cst_20 = arith.constant 0.000000e+00 : f32
    %135 = vector.broadcast %cst_20 : f32 to vector<8x128xf32>
    %136 = arith.maximumf %134, %135 : vector<8x128xf32>
    %137 = arith.truncf %136 : vector<8x128xf32> to vector<8x128xbf16>
    %138 = tpu.concatenate %38, %137 in 1 : vector<8x128xbf16>, vector<8x128xbf16> -> vector<8x256xbf16>
    %c0_21 = arith.constant 0 : index
    %c0_22 = arith.constant 0 : index
    %139 = vector.load %arg8[%c0_21, %c0_22] : memref<256x128xbf16, #tpu.memory_space<vmem>>, vector<256x128xbf16>
    %cst_23 = arith.constant dense<0.000000e+00> : vector<8x128xf32>
    %140 = tpu.matmul %138, %139, %cst_23 {dimension_numbers = #tpu.dot_dimension_numbers<[1], [0], [0], [1], [0, 0, 1, 1], [], []>} : vector<8x256xbf16>, vector<256x128xbf16>, vector<8x128xf32> -> vector<8x128xf32>
    %c0_24 = arith.constant 0 : index
    %c0_25 = arith.constant 0 : index
    %141 = vector.load %arg9[%c0_24, %c0_25] : memref<1x128xf32, #tpu.memory_space<vmem>>, vector<1x128xf32>
    %142 = vector.broadcast %141 : vector<1x128xf32> to vector<8x128xf32>
    %143 = arith.addf %140, %142 : vector<8x128xf32>
    %c0_26 = arith.constant 0 : index
    %c0_27 = arith.constant 0 : index
    %144 = vector.load %arg10[%c0_26, %c0_27] : memref<8x128xf32, #tpu.memory_space<vmem>>, vector<8x128xf32>
    tpu.vector_store %arg10[%c0_26, %c0_27], %143 {strides = array<i32>} : memref<8x128xf32, #tpu.memory_space<vmem>>, vector<8x128xf32>,
    return
  }
  func.func @transform_0(%arg0: i32) -> (i32, i32) {
    %c0_i32 = arith.constant 0 : i32
    %c0_i32_0 = arith.constant 0 : i32
    return %arg0, %c0_i32 : i32, i32
  }
  func.func @transform_1(%arg0: i32) -> (i32, i32) {
    %c0_i32 = arith.constant 0 : i32
    %c0_i32_0 = arith.constant 0 : i32
    %c0_i32_1 = arith.constant 0 : i32
    return %c0_i32, %c0_i32_0 : i32, i32
  }
  func.func @transform_2(%arg0: i32) -> (i32, i32) {
    %c0_i32 = arith.constant 0 : i32
    %c0_i32_0 = arith.constant 0 : i32
    %c0_i32_1 = arith.constant 0 : i32
    return %c0_i32, %c0_i32_0 : i32, i32
  }
  func.func @transform_3(%arg0: i32) -> (i32, i32) {
    %c0_i32 = arith.constant 0 : i32
    %c0_i32_0 = arith.constant 0 : i32
    return %arg0, %c0_i32 : i32, i32
  }
  func.func @transform_4(%arg0: i32) -> (i32, i32) {
    %c0_i32 = arith.constant 0 : i32
    %c0_i32_0 = arith.constant 0 : i32
    return %arg0, %c0_i32 : i32, i32
  }
  func.func @transform_5(%arg0: i32) -> (i32, i32) {
    %c0_i32 = arith.constant 0 : i32
    %c0_i32_0 = arith.constant 0 : i32
    %c0_i32_1 = arith.constant 0 : i32
    return %c0_i32, %c0_i32_0 : i32, i32
  }
  func.func @transform_6(%arg0: i32) -> (i32, i32) {
    %c0_i32 = arith.constant 0 : i32
    %c0_i32_0 = arith.constant 0 : i32
    %c0_i32_1 = arith.constant 0 : i32
    return %c0_i32, %c0_i32_0 : i32, i32
  }
  func.func @transform_7(%arg0: i32) -> (i32, i32) {
    %c0_i32 = arith.constant 0 : i32
    %c0_i32_0 = arith.constant 0 : i32
    %c0_i32_1 = arith.constant 0 : i32
    return %c0_i32, %c0_i32_0 : i32, i32
  }
  func.func @transform_8(%arg0: i32) -> (i32, i32) {
    %c0_i32 = arith.constant 0 : i32
    %c0_i32_0 = arith.constant 0 : i32
    %c0_i32_1 = arith.constant 0 : i32
    return %c0_i32, %c0_i32_0 : i32, i32
  }
  func.func @transform_9(%arg0: i32) -> (i32, i32) {
    %c0_i32 = arith.constant 0 : i32
    %c0_i32_0 = arith.constant 0 : i32
    return %arg0, %c0_i32 : i32, i32
  }
}

</mosaic_0001>

<llo_original>
// kernel: two_tower_forward.1
$region0: #{two_tower_forward.1}
  #allocation0 [shape = 'u32[]', space=smem, size = 0x4, offset = 0x4, fixed_abs, tag = 'smem constant byte address 0x4 - core index']
  #allocation1 [shape = 'u32[72,128]{1,0:T(1,128)}', space=vmem, size = 0x9000, scoped, tag = 'internal scratch']
  %s0 = inlined_call_operand.vmem [shape: s32[8,2], index: 0, kind: input, shape index: {}]
  %s1 = inlined_call_operand.vmem [shape: f32[3,128], index: 1, kind: input, shape index: {}]
  %s2 = inlined_call_operand.vmem [shape: f32[10,128], index: 2, kind: input, shape index: {}]
  %s3 = inlined_call_operand.vmem [shape: bf16[8,384], index: 3, kind: input, shape index: {}]
  %s4 = inlined_call_operand.vmem [shape: bf16[8,384], index: 4, kind: input, shape index: {}]
  %s5 = inlined_call_operand.hbm [shape: bf16[384,128], index: 5, kind: input, shape index: {}]
  %s6 = inlined_call_operand.hbm [shape: bf16[384,128], index: 6, kind: input, shape index: {}]
  %s7 = inlined_call_operand.hbm [shape: bf16[256,128], index: 7, kind: input, shape index: {}]
  %s8 = inlined_call_operand.vmem [shape: f32[1,128], index: 8, kind: input, shape index: {}]
  %s9 = inlined_call_operand.vmem [shape: f32[8,128], index: 9, kind: output, shape index: {}]
  %s10 = sld [smem:[#allocation0]]
  $region58: #{two_tower_forward.1} parent=0
    _
  %s12 = ssub.s32 1, %s10
  %s13 = scalar_select 0, %s12, %s10
  $region1: #{two_tower_forward.1} parent=0
    #allocation2 [shape = 'u8[98304]{0}', space=vmem, size = 0x18000, scoped, tag = 'input window, operand 5, single buffered']
    #allocation3 [shape = 's32[1]{0}', space=sflag, size = 0x4, scoped, tag = 'scoped memory for two_tower_forward.1']
    #allocation4 [shape = 'u8[98304]{0}', space=vmem, size = 0x18000, scoped, tag = 'input window, operand 6, single buffered']
    #allocation5 [shape = 's32[1]{0}', space=sflag, size = 0x4, scoped, tag = 'scoped memory for two_tower_forward.1']
    #allocation6 [shape = 'u8[65536]{0}', space=vmem, size = 0x10000, scoped, tag = 'input window, operand 7, single buffered']
    %14 = vsyncpa [#allocation3], 0
    %15 = vsyncpa [#allocation5], 0
    // Predicated region
    $region2: #{two_tower_forward.1} parent=1 // pred_check
      _
    $region3: #{two_tower_forward.1} parent=1 // pred_check_branch
      %17 = sbr.rel (0) target = $region5
    $region4: #{two_tower_forward.1} parent=1 // pred_region
      _
    $region5: #{two_tower_forward.1} parent=1 // pred_fallthru
      _
    // Predicated region
    $region6: #{two_tower_forward.1} parent=1 // pred_check
      _
    $region7: #{two_tower_forward.1} parent=1 // pred_check_branch
      %19 = sbr.rel (0) target = $region9
    $region8: #{two_tower_forward.1} parent=1 // pred_region
      _
    $region9: #{two_tower_forward.1} parent=1 // pred_fallthru
      _
    // Predicated region
    $region10: #{two_tower_forward.1} parent=1 // pred_check
      _
    $region11: #{two_tower_forward.1} parent=1 // pred_check_branch
      %21 = sbr.rel (0) target = $region13
    $region12: #{two_tower_forward.1} parent=1 // pred_region
      _
    $region13: #{two_tower_forward.1} parent=1 // pred_fallthru
      _
    // Predicated region
    $region14: #{two_tower_forward.1} parent=1 // pred_check
      _
    $region15: #{two_tower_forward.1} parent=1 // pred_check_branch
      %23 = sbr.rel (0) target = $region17
    $region16: #{two_tower_forward.1} parent=1 // pred_region
      _
    $region17: #{two_tower_forward.1} parent=1 // pred_fallthru
      _
    // Predicated region
    $region18: #{two_tower_forward.1} parent=1 // pred_check
      _
    $region19: #{two_tower_forward.1} parent=1 // pred_check_branch
      %25 = sbr.rel (0) target = $region21
    $region20: #{two_tower_forward.1} parent=1 // pred_region
      _
    $region21: #{two_tower_forward.1} parent=1 // pred_fallthru
      _
    // Predicated region
    $region22: #{two_tower_forward.1} parent=1 // pred_check
      _
    $region23: #{two_tower_forward.1} parent=1 // pred_check_branch
      %27 = sbr.rel (0) target = $region25
    $region24: #{two_tower_forward.1} parent=1 // pred_region
      %29 = vsyncadd [#allocation3], 0
      %s30 = sshll.u32 %s5, 4
      %s31 = int_to_ptr.hbm [resolvable:$true] %s30
      %s32 = sshll.u32 [#allocation2], 4
      %s33 = int_to_ptr.vmem [resolvable:$true] %s32
      %38 = dma.hbm_to_vmem [thread:$0]  %s31, 3072, %s33, [#allocation3], 64, 64, 4
    $region25: #{two_tower_forward.1} parent=1 // pred_fallthru
      _
    // Predicated region
    $region26: #{two_tower_forward.1} parent=1 // pred_check
      _
    $region27: #{two_tower_forward.1} parent=1 // pred_check_branch
      %40 = sbr.rel (0) target = $region29
    $region28: #{two_tower_forward.1} parent=1 // pred_region
      %42 = vsyncadd [#allocation5], 0
      %s43 = sshll.u32 %s6, 4
      %s44 = int_to_ptr.hbm [resolvable:$true] %s43
      %s45 = sshll.u32 [#allocation4], 4
      %s46 = int_to_ptr.vmem [resolvable:$true] %s45
      %51 = dma.hbm_to_vmem [thread:$0]  %s44, 3072, %s46, [#allocation5], 64, 64, 4
    $region29: #{two_tower_forward.1} parent=1 // pred_fallthru
      _
    // Predicated region
    $region30: #{two_tower_forward.1} parent=1 // pred_check
      _
    $region31: #{two_tower_forward.1} parent=1 // pred_check_branch
      %53 = sbr.rel (0) target = $region33
    $region32: #{two_tower_forward.1} parent=1 // pred_region
      %55 = vsyncadd [#allocation5], 0
      %s56 = sshll.u32 %s7, 4
      %s57 = int_to_ptr.hbm [resolvable:$true] %s56
      %s58 = sshll.u32 [#allocation6], 4
      %s59 = int_to_ptr.vmem [resolvable:$true] %s58
      %64 = dma.hbm_to_vmem [thread:$0]  %s57, 2048, %s59, [#allocation5], 64, 64, 4
    $region33: #{two_tower_forward.1} parent=1 // pred_fallthru
      _
    // Predicated region
    $region34: #{two_tower_forward.1} parent=1 // pred_check
      _
    $region35: #{two_tower_forward.1} parent=1 // pred_check_branch
      %66 = sbr.rel (0) target = $region37
    $region36: #{two_tower_forward.1} parent=1 // pred_region
      _
    $region37: #{two_tower_forward.1} parent=1 // pred_fallthru
      _
    // Predicated region
    $region38: #{two_tower_forward.1} parent=1 // pred_check
      _
    $region39: #{two_tower_forward.1} parent=1 // pred_check_branch
      %68 = sbr.rel (0) target = $region41
    $region40: #{two_tower_forward.1} parent=1 // pred_region
      %70 = dma.done [#allocation3], 3072
    $region41: #{two_tower_forward.1} parent=1 // pred_fallthru
      _
    // Predicated region
    $region42: #{two_tower_forward.1} parent=1 // pred_check
      _
    $region43: #{two_tower_forward.1} parent=1 // pred_check_branch
      %72 = sbr.rel (0) target = $region45
    $region44: #{two_tower_forward.1} parent=1 // pred_region
      %74 = dma.done [#allocation5], 3072
    $region45: #{two_tower_forward.1} parent=1 // pred_fallthru
      _
    // Predicated region
    $region46: #{two_tower_forward.1} parent=1 // pred_check
      _
    $region47: #{two_tower_forward.1} parent=1 // pred_check_branch
      %76 = sbr.rel (0) target = $region49
    $region48: #{two_tower_forward.1} parent=1 // pred_region
      %78 = dma.done [#allocation5], 2048
    $region49: #{two_tower_forward.1} parent=1 // pred_fallthru
      _
    %v79 = vld [vmem:[%s0] sm:$0xff]
    %v80 = vld [vmem:[%s1] sm:$0x7]
    %vm81 = vcmp.eq.s32.totalorder %v79, 0
    %v82 = vsel %vm81, 1, 0
    %v83 = vcvt.s32.f32 %v82
    %85 = vset.pattern.permute.xlu0 0
    %86 = vperm.xlu0 %85, %v83
    %v87 = vpop.permute.xlu0 %86
    %v89 = vperm.slane %v80, 0
    %v90 = vmul.f32 %v87, %v89
    %v91 = vadd.f32 %v90, 0.0
    %vm92 = vcmp.eq.s32.totalorder %v79, 1
    %v93 = vsel %vm92, 1, 0
    %v94 = vcvt.s32.f32 %v93
    %96 = vset.pattern.permute.xlu0 0
    %97 = vperm.xlu0 %96, %v94
    %v98 = vpop.permute.xlu0 %97
    %v100 = vperm.slane %v80, 1
    %v101 = vmul.f32 %v98, %v100
    %v102 = vadd.f32 %v91, %v101
    %vm103 = vcmp.eq.s32.totalorder %v79, 2
    %v104 = vsel %vm103, 1, 0
    %v105 = vcvt.s32.f32 %v104
    %107 = vset.pattern.permute.xlu0 0
    %108 = vperm.xlu0 %107, %v105
    %v109 = vpop.permute.xlu0 %108
    %v111 = vperm.slane %v80, 2
    %v112 = vmul.f32 %v109, %v111
    %v113 = vadd.f32 %v102, %v112
    %v114 = vld [vmem:[%s3] sm:$0xff]
    %v115 = vld [vmem:[%s3 + $0x8] sm:$0xf]
    %v116 = vld [vmem:[#allocation2] sm:$0xf]
    %v117 = vld [vmem:[#allocation2 + $0x4] sm:$0xf]
    %v118 = vld [vmem:[#allocation2 + $0x8] sm:$0xf]
    %v119 = vld [vmem:[#allocation2 + $0xc] sm:$0xf]
    %v120 = vld [vmem:[#allocation2 + $0x10] sm:$0xf]
    %v121 = vld [vmem:[#allocation2 + $0x14] sm:$0xf]
    %v122 = vld [vmem:[#allocation2 + $0x18] sm:$0xf]
    %v123 = vld [vmem:[#allocation2 + $0x1c] sm:$0xf]
    %v124 = vld [vmem:[#allocation2 + $0x20] sm:$0xf]
    %v125 = vld [vmem:[#allocation2 + $0x24] sm:$0xf]
    %v126 = vld [vmem:[#allocation2 + $0x28] sm:$0xf]
    %v127 = vld [vmem:[#allocation2 + $0x2c] sm:$0xf]
    %v128 = vld [vmem:[#allocation2 + $0x30] sm:$0xf]
    %v129 = vld [vmem:[#allocation2 + $0x34] sm:$0xf]
    %v130 = vld [vmem:[#allocation2 + $0x38] sm:$0xf]
    %v131 = vld [vmem:[#allocation2 + $0x3c] sm:$0xf]
    %v132 = vld [vmem:[#allocation2 + $0x40] sm:$0xf]
    %v133 = vld [vmem:[#allocation2 + $0x44] sm:$0xf]
    %v134 = vld [vmem:[#allocation2 + $0x48] sm:$0xf]
    %v135 = vld [vmem:[#allocation2 + $0x4c] sm:$0xf]
    %v136 = vld [vmem:[#allocation2 + $0x50] sm:$0xf]
    %v137 = vld [vmem:[#allocation2 + $0x54] sm:$0xf]
    %v138 = vld [vmem:[#allocation2 + $0x58] sm:$0xf]
    %v139 = vld [vmem:[#allocation2 + $0x5c] sm:$0xf]
    %v140 = vld [vmem:[#allocation2 + $0x60] sm:$0xf]
    %v141 = vld [vmem:[#allocation2 + $0x64] sm:$0xf]
    %v142 = vld [vmem:[#allocation2 + $0x68] sm:$0xf]
    %v143 = vld [vmem:[#allocation2 + $0x6c] sm:$0xf]
    %v144 = vld [vmem:[#allocation2 + $0x70] sm:$0xf]
    %v145 = vld [vmem:[#allocation2 + $0x74] sm:$0xf]
    %v146 = vld [vmem:[#allocation2 + $0x78] sm:$0xf]
    %v147 = vld [vmem:[#allocation2 + $0x7c] sm:$0xf]
    %v148 = vld [vmem:[#allocation2 + $0x80] sm:$0xf]
    %v149 = vld [vmem:[#allocation2 + $0x84] sm:$0xf]
    %v150 = vld [vmem:[#allocation2 + $0x88] sm:$0xf]
    %v151 = vld [vmem:[#allocation2 + $0x8c] sm:$0xf]
    %v152 = vld [vmem:[#allocation2 + $0x90] sm:$0xf]
    %v153 = vld [vmem:[#allocation2 + $0x94] sm:$0xf]
    %v154 = vld [vmem:[#allocation2 + $0x98] sm:$0xf]
    %v155 = vld [vmem:[#allocation2 + $0x9c] sm:$0xf]
    %v156 = vld [vmem:[#allocation2 + $0xa0] sm:$0xf]
    %v157 = vld [vmem:[#allocation2 + $0xa4] sm:$0xf]
    %v158 = vld [vmem:[#allocation2 + $0xa8] sm:$0xf]
    %v159 = vld [vmem:[#allocation2 + $0xac] sm:$0xf]
    %v160 = vld [vmem:[#allocation2 + $0xb0] sm:$0xf]
    %v161 = vld [vmem:[#allocation2 + $0xb4] sm:$0xf]
    %v162 = vld [vmem:[#allocation2 + $0xb8] sm:$0xf]
    %v163 = vld [vmem:[#allocation2 + $0xbc] sm:$0xf]
    %v166 = vunpack.c.l.b16 %v114
    %v167 = vunpack.c.h.b16 %v114
    %v168 = vunpack.c.l.b16 %v115
    %v169 = vpack.c.b16 %v166, %v166
    %v170 = vpack.c.b16 %v167, %v167
    %v171 = vpack.c.b16 %v168, %v168
    %v223 = vunpack.c.l.b16 %v116
    %v224 = vunpack.c.l.b16 %v117
    %v225 = vunpack.c.l.b16 %v118
    %v226 = vunpack.c.l.b16 %v119
    %v227 = vunpack.c.l.b16 %v120
    %v228 = vunpack.c.l.b16 %v121
    %v229 = vunpack.c.l.b16 %v122
    %v230 = vunpack.c.l.b16 %v123
    %v231 = vunpack.c.l.b16 %v124
    %v232 = vunpack.c.l.b16 %v125
    %v233 = vunpack.c.l.b16 %v126
    %v234 = vunpack.c.l.b16 %v127
    %v235 = vunpack.c.l.b16 %v128
    %v236 = vunpack.c.l.b16 %v129
    %v237 = vunpack.c.l.b16 %v130
    %v238 = vunpack.c.l.b16 %v131
    %v239 = vunpack.c.l.b16 %v132
    %v240 = vunpack.c.l.b16 %v133
    %v241 = vunpack.c.l.b16 %v134
    %v242 = vunpack.c.l.b16 %v135
    %v243 = vunpack.c.l.b16 %v136
    %v244 = vunpack.c.l.b16 %v137
    %v245 = vunpack.c.l.b16 %v138
    %v246 = vunpack.c.l.b16 %v139
    %v247 = vunpack.c.l.b16 %v140
    %v248 = vunpack.c.l.b16 %v141
    %v249 = vunpack.c.l.b16 %v142
    %v250 = vunpack.c.l.b16 %v143
    %v251 = vunpack.c.l.b16 %v144
    %v252 = vunpack.c.l.b16 %v145
    %v253 = vunpack.c.l.b16 %v146
    %v254 = vunpack.c.l.b16 %v147
    %v255 = vunpack.c.l.b16 %v148
    %v256 = vunpack.c.l.b16 %v149
    %v257 = vunpack.c.l.b16 %v150
    %v258 = vunpack.c.l.b16 %v151
    %v259 = vunpack.c.l.b16 %v152
    %v260 = vunpack.c.l.b16 %v153
    %v261 = vunpack.c.l.b16 %v154
    %v262 = vunpack.c.l.b16 %v155
    %v263 = vunpack.c.l.b16 %v156
    %v264 = vunpack.c.l.b16 %v157
    %v265 = vunpack.c.l.b16 %v158
    %v266 = vunpack.c.l.b16 %v159
    %v267 = vunpack.c.l.b16 %v160
    %v268 = vunpack.c.l.b16 %v161
    %v269 = vunpack.c.l.b16 %v162
    %v270 = vunpack.c.l.b16 %v163
    %v271 = vpack.c.b16 %v224, %v223
    %v272 = vpack.c.b16 %v226, %v225
    %v273 = vpack.c.b16 %v228, %v227
    %v274 = vpack.c.b16 %v230, %v229
    %v275 = vpack.c.b16 %v232, %v231
    %v276 = vpack.c.b16 %v234, %v233
    %v277 = vpack.c.b16 %v236, %v235
    %v278 = vpack.c.b16 %v238, %v237
    %v279 = vpack.c.b16 %v240, %v239
    %v280 = vpack.c.b16 %v242, %v241
    %v281 = vpack.c.b16 %v244, %v243
    %v282 = vpack.c.b16 %v246, %v245
    %v283 = vpack.c.b16 %v248, %v247
    %v284 = vpack.c.b16 %v250, %v249
    %v285 = vpack.c.b16 %v252, %v251
    %v286 = vpack.c.b16 %v254, %v253
    %v287 = vpack.c.b16 %v256, %v255
    %v288 = vpack.c.b16 %v258, %v257
    %v289 = vpack.c.b16 %v260, %v259
    %v290 = vpack.c.b16 %v262, %v261
    %v291 = vpack.c.b16 %v264, %v263
    %v292 = vpack.c.b16 %v266, %v265
    %v293 = vpack.c.b16 %v268, %v267
    %v294 = vpack.c.b16 %v270, %v269
    %319 = vmatpush.bf16.msra.mxu0 %v278
    %320 = vmatpush.bf16.msra.mxu0 %v277
    %321 = vmatpush.bf16.msra.mxu0 %v276
    %322 = vmatpush.bf16.msra.mxu0 %v275
    %323 = vmatpush.bf16.msra.mxu0 %v274
    %324 = vmatpush.bf16.msra.mxu0 %v273
    %325 = vmatpush.bf16.msra.mxu0 %v272
    %326 = vmatpush.bf16.msra.mxu0 %v271
    %327 = vmatmul.bf16.gmra.mxu0 %v169
    %v328 = vpop.f32.mrf.mxu0
    %v329 = vadd.f32 0.0, %v328
    %v330 = vpop.f32.mrf.mxu0
    %331 = vdwg.mxu0
    %332 = vmatpush.bf16.msra.mxu0 %v286
    %333 = vmatpush.bf16.msra.mxu0 %v285
    %334 = vmatpush.bf16.msra.mxu0 %v284
    %335 = vmatpush.bf16.msra.mxu0 %v283
    %336 = vmatpush.bf16.msra.mxu0 %v282
    %337 = vmatpush.bf16.msra.mxu0 %v281
    %338 = vmatpush.bf16.msra.mxu0 %v280
    %339 = vmatpush.bf16.msra.mxu0 %v279
    %340 = vmatmul.bf16.gmra.mxu0 %v170
    %v341 = vpop.f32.mrf.mxu0
    %v342 = vadd.f32 %v329, %v341
    %v343 = vpop.f32.mrf.mxu0
    %344 = vdwg.mxu0
    %345 = vmatpush.bf16.msra.mxu0 %v294
    %346 = vmatpush.bf16.msra.mxu0 %v293
    %347 = vmatpush.bf16.msra.mxu0 %v292
    %348 = vmatpush.bf16.msra.mxu0 %v291
    %349 = vmatpush.bf16.msra.mxu0 %v290
    %350 = vmatpush.bf16.msra.mxu0 %v289
    %351 = vmatpush.bf16.msra.mxu0 %v288
    %352 = vmatpush.bf16.msra.mxu0 %v287
    %353 = vmatmul.bf16.gmra.mxu0 %v171
    %v354 = vpop.f32.mrf.mxu0
    %v355 = vadd.f32 %v342, %v354
    %v356 = vpop.f32.mrf.mxu0
    %357 = vdwg.mxu0
    %v358 = vadd.f32 %v113, %v355
    %v359 = vmax.f32 %v358, 0.0
    %v360 = vpack.c.bf16 %v359, %v359
    %v361 = vld [vmem:[%s2] sm:$0xff]
    %v362 = vld [vmem:[%s2 + $0x8] sm:$0x3]
    %363 = vset.pattern.permute.xlu0 1
    %364 = vperm.xlu0 %363, %v83
    %v365 = vpop.permute.xlu0 %364
    %v367 = vperm.slane %v361, 0
    %v368 = vmul.f32 %v365, %v367
    %v369 = vadd.f32 %v368, 0.0
    %370 = vset.pattern.permute.xlu0 1
    %371 = vperm.xlu0 %370, %v94
    %v372 = vpop.permute.xlu0 %371
    %v374 = vperm.slane %v361, 1
    %v375 = vmul.f32 %v372, %v374
    %v376 = vadd.f32 %v369, %v375
    %377 = vset.pattern.permute.xlu0 1
    %378 = vperm.xlu0 %377, %v105
    %v379 = vpop.permute.xlu0 %378
    %v381 = vperm.slane %v361, 2
    %v382 = vmul.f32 %v379, %v381
    %v383 = vadd.f32 %v376, %v382
    %vm384 = vcmp.eq.s32.totalorder %v79, 3
    %v385 = vsel %vm384, 1, 0
    %v386 = vcvt.s32.f32 %v385
    %388 = vset.pattern.permute.xlu0 1
    %389 = vperm.xlu0 %388, %v386
    %v390 = vpop.permute.xlu0 %389
    %v392 = vperm.slane %v361, 3
    %v393 = vmul.f32 %v390, %v392
    %v394 = vadd.f32 %v383, %v393
    %vm395 = vcmp.eq.s32.totalorder %v79, 4
    %v396 = vsel %vm395, 1, 0
    %v397 = vcvt.s32.f32 %v396
    %399 = vset.pattern.permute.xlu0 1
    %400 = vperm.xlu0 %399, %v397
    %v401 = vpop.permute.xlu0 %400
    %v403 = vperm.slane %v361, 4
    %v404 = vmul.f32 %v401, %v403
    %v405 = vadd.f32 %v394, %v404
    %vm406 = vcmp.eq.s32.totalorder %v79, 5
    %v407 = vsel %vm406, 1, 0
    %v408 = vcvt.s32.f32 %v407
    %410 = vset.pattern.permute.xlu0 1
    %411 = vperm.xlu0 %410, %v408
    %v412 = vpop.permute.xlu0 %411
    %v414 = vperm.slane %v361, 5
    %v415 = vmul.f32 %v412, %v414
    %v416 = vadd.f32 %v405, %v415
    %vm417 = vcmp.eq.s32.totalorder %v79, 6
    %v418 = vsel %vm417, 1, 0
    %v419 = vcvt.s32.f32 %v418
    %421 = vset.pattern.permute.xlu0 1
    %422 = vperm.xlu0 %421, %v419
    %v423 = vpop.permute.xlu0 %422
    %v425 = vperm.slane %v361, 6
    %v426 = vmul.f32 %v423, %v425
    %v427 = vadd.f32 %v416, %v426
    %vm428 = vcmp.eq.s32.totalorder %v79, 7
    %v429 = vsel %vm428, 1, 0
    %v430 = vcvt.s32.f32 %v429
    %432 = vset.pattern.permute.xlu0 1
    %433 = vperm.xlu0 %432, %v430
    %v434 = vpop.permute.xlu0 %433
    %v436 = vperm.slane %v361, 7
    %v437 = vmul.f32 %v434, %v436
    %v438 = vadd.f32 %v427, %v437
    %vm439 = vcmp.eq.s32.totalorder %v79, 8
    %v440 = vsel %vm439, 1, 0
    %v441 = vcvt.s32.f32 %v440
    %443 = vset.pattern.permute.xlu0 1
    %444 = vperm.xlu0 %443, %v441
    %v445 = vpop.permute.xlu0 %444
    %v447 = vperm.slane %v362, 0
    %v448 = vmul.f32 %v445, %v447
    %v449 = vadd.f32 %v438, %v448
    %vm450 = vcmp.eq.s32.totalorder %v79, 9
    %v451 = vsel %vm450, 1, 0
    %v452 = vcvt.s32.f32 %v451
    %454 = vset.pattern.permute.xlu0 1
    %455 = vperm.xlu0 %454, %v452
    %v456 = vpop.permute.xlu0 %455
    %v458 = vperm.slane %v362, 1
    %v459 = vmul.f32 %v456, %v458
    %v460 = vadd.f32 %v449, %v459
    %v461 = vld [vmem:[%s4] sm:$0xff]
    %v462 = vld [vmem:[%s4 + $0x8] sm:$0xf]
    %v463 = vld [vmem:[#allocation4] sm:$0xf]
    %v464 = vld [vmem:[#allocation4 + $0x4] sm:$0xf]
    %v465 = vld [vmem:[#allocation4 + $0x8] sm:$0xf]
    %v466 = vld [vmem:[#allocation4 + $0xc] sm:$0xf]
    %v467 = vld [vmem:[#allocation4 + $0x10] sm:$0xf]
    %v468 = vld [vmem:[#allocation4 + $0x14] sm:$0xf]
    %v469 = vld [vmem:[#allocation4 + $0x18] sm:$0xf]
    %v470 = vld [vmem:[#allocation4 + $0x1c] sm:$0xf]
    %v471 = vld [vmem:[#allocation4 + $0x20] sm:$0xf]
    %v472 = vld [vmem:[#allocation4 + $0x24] sm:$0xf]
    %v473 = vld [vmem:[#allocation4 + $0x28] sm:$0xf]
    %v474 = vld [vmem:[#allocation4 + $0x2c] sm:$0xf]
    %v475 = vld [vmem:[#allocation4 + $0x30] sm:$0xf]
    %v476 = vld [vmem:[#allocation4 + $0x34] sm:$0xf]
    %v477 = vld [vmem:[#allocation4 + $0x38] sm:$0xf]
    %v478 = vld [vmem:[#allocation4 + $0x3c] sm:$0xf]
    %v479 = vld [vmem:[#allocation4 + $0x40] sm:$0xf]
    %v480 = vld [vmem:[#allocation4 + $0x44] sm:$0xf]
    %v481 = vld [vmem:[#allocation4 + $0x48] sm:$0xf]
    %v482 = vld [vmem:[#allocation4 + $0x4c] sm:$0xf]
    %v483 = vld [vmem:[#allocation4 + $0x50] sm:$0xf]
    %v484 = vld [vmem:[#allocation4 + $0x54] sm:$0xf]
    %v485 = vld [vmem:[#allocation4 + $0x58] sm:$0xf]
    %v486 = vld [vmem:[#allocation4 + $0x5c] sm:$0xf]
    %v487 = vld [vmem:[#allocation4 + $0x60] sm:$0xf]
    %v488 = vld [vmem:[#allocation4 + $0x64] sm:$0xf]
    %v489 = vld [vmem:[#allocation4 + $0x68] sm:$0xf]
    %v490 = vld [vmem:[#allocation4 + $0x6c] sm:$0xf]
    %v491 = vld [vmem:[#allocation4 + $0x70] sm:$0xf]
    %v492 = vld [vmem:[#allocation4 + $0x74] sm:$0xf]
    %v493 = vld [vmem:[#allocation4 + $0x78] sm:$0xf]
    %v494 = vld [vmem:[#allocation4 + $0x7c] sm:$0xf]
    %v495 = vld [vmem:[#allocation4 + $0x80] sm:$0xf]
    %v496 = vld [vmem:[#allocation4 + $0x84] sm:$0xf]
    %v497 = vld [vmem:[#allocation4 + $0x88] sm:$0xf]
    %v498 = vld [vmem:[#allocation4 + $0x8c] sm:$0xf]
    %v499 = vld [vmem:[#allocation4 + $0x90] sm:$0xf]
    %v500 = vld [vmem:[#allocation4 + $0x94] sm:$0xf]
    %v501 = vld [vmem:[#allocation4 + $0x98] sm:$0xf]
    %v502 = vld [vmem:[#allocation4 + $0x9c] sm:$0xf]
    %v503 = vld [vmem:[#allocation4 + $0xa0] sm:$0xf]
    %v504 = vld [vmem:[#allocation4 + $0xa4] sm:$0xf]
    %v505 = vld [vmem:[#allocation4 + $0xa8] sm:$0xf]
    %v506 = vld [vmem:[#allocation4 + $0xac] sm:$0xf]
    %v507 = vld [vmem:[#allocation4 + $0xb0] sm:$0xf]
    %v508 = vld [vmem:[#allocation4 + $0xb4] sm:$0xf]
    %v509 = vld [vmem:[#allocation4 + $0xb8] sm:$0xf]
    %v510 = vld [vmem:[#allocation4 + $0xbc] sm:$0xf]
    %v513 = vunpack.c.l.b16 %v461
    %v514 = vunpack.c.h.b16 %v461
    %v515 = vunpack.c.l.b16 %v462
    %v516 = vpack.c.b16 %v513, %v513
    %v517 = vpack.c.b16 %v514, %v514
    %v518 = vpack.c.b16 %v515, %v515
    %v570 = vunpack.c.l.b16 %v463
    %v571 = vunpack.c.l.b16 %v464
    %v572 = vunpack.c.l.b16 %v465
    %v573 = vunpack.c.l.b16 %v466
    %v574 = vunpack.c.l.b16 %v467
    %v575 = vunpack.c.l.b16 %v468
    %v576 = vunpack.c.l.b16 %v469
    %v577 = vunpack.c.l.b16 %v470
    %v578 = vunpack.c.l.b16 %v471
    %v579 = vunpack.c.l.b16 %v472
    %v580 = vunpack.c.l.b16 %v473
    %v581 = vunpack.c.l.b16 %v474
    %v582 = vunpack.c.l.b16 %v475
    %v583 = vunpack.c.l.b16 %v476
    %v584 = vunpack.c.l.b16 %v477
    %v585 = vunpack.c.l.b16 %v478
    %v586 = vunpack.c.l.b16 %v479
    %v587 = vunpack.c.l.b16 %v480
    %v588 = vunpack.c.l.b16 %v481
    %v589 = vunpack.c.l.b16 %v482
    %v590 = vunpack.c.l.b16 %v483
    %v591 = vunpack.c.l.b16 %v484
    %v592 = vunpack.c.l.b16 %v485
    %v593 = vunpack.c.l.b16 %v486
    %v594 = vunpack.c.l.b16 %v487
    %v595 = vunpack.c.l.b16 %v488
    %v596 = vunpack.c.l.b16 %v489
    %v597 = vunpack.c.l.b16 %v490
    %v598 = vunpack.c.l.b16 %v491
    %v599 = vunpack.c.l.b16 %v492
    %v600 = vunpack.c.l.b16 %v493
    %v601 = vunpack.c.l.b16 %v494
    %v602 = vunpack.c.l.b16 %v495
    %v603 = vunpack.c.l.b16 %v496
    %v604 = vunpack.c.l.b16 %v497
    %v605 = vunpack.c.l.b16 %v498
    %v606 = vunpack.c.l.b16 %v499
    %v607 = vunpack.c.l.b16 %v500
    %v608 = vunpack.c.l.b16 %v501
    %v609 = vunpack.c.l.b16 %v502
    %v610 = vunpack.c.l.b16 %v503
    %v611 = vunpack.c.l.b16 %v504
    %v612 = vunpack.c.l.b16 %v505
    %v613 = vunpack.c.l.b16 %v506
    %v614 = vunpack.c.l.b16 %v507
    %v615 = vunpack.c.l.b16 %v508
    %v616 = vunpack.c.l.b16 %v509
    %v617 = vunpack.c.l.b16 %v510
    %v618 = vpack.c.b16 %v571, %v570
    %v619 = vpack.c.b16 %v573, %v572
    %v620 = vpack.c.b16 %v575, %v574
    %v621 = vpack.c.b16 %v577, %v576
    %v622 = vpack.c.b16 %v579, %v578
    %v623 = vpack.c.b16 %v581, %v580
    %v624 = vpack.c.b16 %v583, %v582
    %v625 = vpack.c.b16 %v585, %v584
    %v626 = vpack.c.b16 %v587, %v586
    %v627 = vpack.c.b16 %v589, %v588
    %v628 = vpack.c.b16 %v591, %v590
    %v629 = vpack.c.b16 %v593, %v592
    %v630 = vpack.c.b16 %v595, %v594
    %v631 = vpack.c.b16 %v597, %v596
    %v632 = vpack.c.b16 %v599, %v598
    %v633 = vpack.c.b16 %v601, %v600
    %v634 = vpack.c.b16 %v603, %v602
    %v635 = vpack.c.b16 %v605, %v604
    %v636 = vpack.c.b16 %v607, %v606
    %v637 = vpack.c.b16 %v609, %v608
    %v638 = vpack.c.b16 %v611, %v610
    %v639 = vpack.c.b16 %v613, %v612
    %v640 = vpack.c.b16 %v615, %v614
    %v641 = vpack.c.b16 %v617, %v616
    %666 = vmatpush.bf16.msra.mxu0 %v625
    %667 = vmatpush.bf16.msra.mxu0 %v624
    %668 = vmatpush.bf16.msra.mxu0 %v623
    %669 = vmatpush.bf16.msra.mxu0 %v622
    %670 = vmatpush.bf16.msra.mxu0 %v621
    %671 = vmatpush.bf16.msra.mxu0 %v620
    %672 = vmatpush.bf16.msra.mxu0 %v619
    %673 = vmatpush.bf16.msra.mxu0 %v618
    %674 = vmatmul.bf16.gmra.mxu0 %v516
    %v675 = vpop.f32.mrf.mxu0
    %v676 = vadd.f32 0.0, %v675
    %v677 = vpop.f32.mrf.mxu0
    %678 = vdwg.mxu0
    %679 = vmatpush.bf16.msra.mxu0 %v633
    %680 = vmatpush.bf16.msra.mxu0 %v632
    %681 = vmatpush.bf16.msra.mxu0 %v631
    %682 = vmatpush.bf16.msra.mxu0 %v630
    %683 = vmatpush.bf16.msra.mxu0 %v629
    %684 = vmatpush.bf16.msra.mxu0 %v628
    %685 = vmatpush.bf16.msra.mxu0 %v627
    %686 = vmatpush.bf16.msra.mxu0 %v626
    %687 = vmatmul.bf16.gmra.mxu0 %v517
    %v688 = vpop.f32.mrf.mxu0
    %v689 = vadd.f32 %v676, %v688
    %v690 = vpop.f32.mrf.mxu0
    %691 = vdwg.mxu0
    %692 = vmatpush.bf16.msra.mxu0 %v641
    %693 = vmatpush.bf16.msra.mxu0 %v640
    %694 = vmatpush.bf16.msra.mxu0 %v639
    %695 = vmatpush.bf16.msra.mxu0 %v638
    %696 = vmatpush.bf16.msra.mxu0 %v637
    %697 = vmatpush.bf16.msra.mxu0 %v636
    %698 = vmatpush.bf16.msra.mxu0 %v635
    %699 = vmatpush.bf16.msra.mxu0 %v634
    %700 = vmatmul.bf16.gmra.mxu0 %v518
    %v701 = vpop.f32.mrf.mxu0
    %v702 = vadd.f32 %v689, %v701
    %v703 = vpop.f32.mrf.mxu0
    %704 = vdwg.mxu0
    %v705 = vadd.f32 %v460, %v702
    %v706 = vmax.f32 %v705, 0.0
    %v707 = vpack.c.bf16 %v706, %v706
    %v708 = vld [vmem:[#allocation6] sm:$0xf]
    %v709 = vld [vmem:[#allocation6 + $0x4] sm:$0xf]
    %v710 = vld [vmem:[#allocation6 + $0x8] sm:$0xf]
    %v711 = vld [vmem:[#allocation6 + $0xc] sm:$0xf]
    %v712 = vld [vmem:[#allocation6 + $0x10] sm:$0xf]
    %v713 = vld [vmem:[#allocation6 + $0x14] sm:$0xf]
    %v714 = vld [vmem:[#allocation6 + $0x18] sm:$0xf]
    %v715 = vld [vmem:[#allocation6 + $0x1c] sm:$0xf]
    %v716 = vld [vmem:[#allocation6 + $0x20] sm:$0xf]
    %v717 = vld [vmem:[#allocation6 + $0x24] sm:$0xf]
    %v718 = vld [vmem:[#allocation6 + $0x28] sm:$0xf]
    %v719 = vld [vmem:[#allocation6 + $0x2c] sm:$0xf]
    %v720 = vld [vmem:[#allocation6 + $0x30] sm:$0xf]
    %v721 = vld [vmem:[#allocation6 + $0x34] sm:$0xf]
    %v722 = vld [vmem:[#allocation6 + $0x38] sm:$0xf]
    %v723 = vld [vmem:[#allocation6 + $0x3c] sm:$0xf]
    %v724 = vld [vmem:[#allocation6 + $0x40] sm:$0xf]
    %v725 = vld [vmem:[#allocation6 + $0x44] sm:$0xf]
    %v726 = vld [vmem:[#allocation6 + $0x48] sm:$0xf]
    %v727 = vld [vmem:[#allocation6 + $0x4c] sm:$0xf]
    %v728 = vld [vmem:[#allocation6 + $0x50] sm:$0xf]
    %v729 = vld [vmem:[#allocation6 + $0x54] sm:$0xf]
    %v730 = vld [vmem:[#allocation6 + $0x58] sm:$0xf]
    %v731 = vld [vmem:[#allocation6 + $0x5c] sm:$0xf]
    %v732 = vld [vmem:[#allocation6 + $0x60] sm:$0xf]
    %v733 = vld [vmem:[#allocation6 + $0x64] sm:$0xf]
    %v734 = vld [vmem:[#allocation6 + $0x68] sm:$0xf]
    %v735 = vld [vmem:[#allocation6 + $0x6c] sm:$0xf]
    %v736 = vld [vmem:[#allocation6 + $0x70] sm:$0xf]
    %v737 = vld [vmem:[#allocation6 + $0x74] sm:$0xf]
    %v738 = vld [vmem:[#allocation6 + $0x78] sm:$0xf]
    %v739 = vld [vmem:[#allocation6 + $0x7c] sm:$0xf]
    %v740 = vld [vmem:[%s8] sm:$0x1]
    %v742 = vperm.slane %v740, 0
    %v776 = vunpack.c.l.b16 %v708
    %v777 = vunpack.c.l.b16 %v709
    %v778 = vunpack.c.l.b16 %v710
    %v779 = vunpack.c.l.b16 %v711
    %v780 = vunpack.c.l.b16 %v712
    %v781 = vunpack.c.l.b16 %v713
    %v782 = vunpack.c.l.b16 %v714
    %v783 = vunpack.c.l.b16 %v715
    %v784 = vunpack.c.l.b16 %v716
    %v785 = vunpack.c.l.b16 %v717
    %v786 = vunpack.c.l.b16 %v718
    %v787 = vunpack.c.l.b16 %v719
    %v788 = vunpack.c.l.b16 %v720
    %v789 = vunpack.c.l.b16 %v721
    %v790 = vunpack.c.l.b16 %v722
    %v791 = vunpack.c.l.b16 %v723
    %v792 = vunpack.c.l.b16 %v724
    %v793 = vunpack.c.l.b16 %v725
    %v794 = vunpack.c.l.b16 %v726
    %v795 = vunpack.c.l.b16 %v727
    %v796 = vunpack.c.l.b16 %v728
    %v797 = vunpack.c.l.b16 %v729
    %v798 = vunpack.c.l.b16 %v730
    %v799 = vunpack.c.l.b16 %v731
    %v800 = vunpack.c.l.b16 %v732
    %v801 = vunpack.c.l.b16 %v733
    %v802 = vunpack.c.l.b16 %v734
    %v803 = vunpack.c.l.b16 %v735
    %v804 = vunpack.c.l.b16 %v736
    %v805 = vunpack.c.l.b16 %v737
    %v806 = vunpack.c.l.b16 %v738
    %v807 = vunpack.c.l.b16 %v739
    %v808 = vpack.c.b16 %v777, %v776
    %v809 = vpack.c.b16 %v779, %v778
    %v810 = vpack.c.b16 %v781, %v780
    %v811 = vpack.c.b16 %v783, %v782
    %v812 = vpack.c.b16 %v785, %v784
    %v813 = vpack.c.b16 %v787, %v786
    %v814 = vpack.c.b16 %v789, %v788
    %v815 = vpack.c.b16 %v791, %v790
    %v816 = vpack.c.b16 %v793, %v792
    %v817 = vpack.c.b16 %v795, %v794
    %v818 = vpack.c.b16 %v797, %v796
    %v819 = vpack.c.b16 %v799, %v798
    %v820 = vpack.c.b16 %v801, %v800
    %v821 = vpack.c.b16 %v803, %v802
    %v822 = vpack.c.b16 %v805, %v804
    %v823 = vpack.c.b16 %v807, %v806
    %840 = vmatpush.bf16.msra.mxu0 %v815
    %841 = vmatpush.bf16.msra.mxu0 %v814
    %842 = vmatpush.bf16.msra.mxu0 %v813
    %843 = vmatpush.bf16.msra.mxu0 %v812
    %844 = vmatpush.bf16.msra.mxu0 %v811
    %845 = vmatpush.bf16.msra.mxu0 %v810
    %846 = vmatpush.bf16.msra.mxu0 %v809
    %847 = vmatpush.bf16.msra.mxu0 %v808
    %848 = vmatmul.bf16.gmra.mxu0 %v360
    %v849 = vpop.f32.mrf.mxu0
    %v850 = vadd.f32 %v742, %v849
    %v851 = vpop.f32.mrf.mxu0
    %852 = vdwg.mxu0
    %853 = vmatpush.bf16.msra.mxu0 %v823
    %854 = vmatpush.bf16.msra.mxu0 %v822
    %855 = vmatpush.bf16.msra.mxu0 %v821
    %856 = vmatpush.bf16.msra.mxu0 %v820
    %857 = vmatpush.bf16.msra.mxu0 %v819
    %858 = vmatpush.bf16.msra.mxu0 %v818
    %859 = vmatpush.bf16.msra.mxu0 %v817
    %860 = vmatpush.bf16.msra.mxu0 %v816
    %861 = vmatmul.bf16.gmra.mxu0 %v707
    %v862 = vpop.f32.mrf.mxu0
    %v863 = vadd.f32 %v850, %v862
    %v864 = vpop.f32.mrf.mxu0
    %865 = vdwg.mxu0
    %866 = vst [vmem:[%s9] sm:$0xff] %v863
    // Predicated region
    $region50: #{two_tower_forward.1} parent=1 // pred_check
      _
    $region51: #{two_tower_forward.1} parent=1 // pred_check_branch
      %868 = sbr.rel (0) target = $region53
    $region52: #{two_tower_forward.1} parent=1 // pred_region
      _
    $region53: #{two_tower_forward.1} parent=1 // pred_fallthru
      _
    // Predicated region
    $region54: #{two_tower_forward.1} parent=1 // pred_check
      _
    $region55: #{two_tower_forward.1} parent=1 // pred_check_branch
      %870 = sbr.rel (0) target = $region57
    $region56: #{two_tower_forward.1} parent=1 // pred_region
      _
    $region57: #{two_tower_forward.1} parent=1 // pred_fallthru
      _
    %871 = vsyncpa [#allocation3], 1
    %872 = vsyncpa [#allocation5], 1

</llo_original>
